<compile_context>
chip_gen: v7x
topology: tpu7x:2x2x1
jax: 0.10.0
libtpu: 0.0.40
codegen_flags: <defaults>
</compile_context>

<pallas_src>
import jax
import jax.numpy as jnp
from jax.experimental import pallas as pl
from jax.experimental.pallas import tpu as pltpu


def _fcn_head_kernel(p_ref, w1_ref, scale_ref, bias_ref, w2_ref, b2_ref, o_ref):
    # p_ref    : (1, 9*Cin, TP)  bf16 im2col patches (channels-first), TP pixels
    # w1_ref   : (Cinter, 9*Cin) bf16 fused 3x3 conv weights
    # scale_ref: (Cinter, 1)     f32 folded BN scale
    # bias_ref : (Cinter, 1)     f32 folded BN bias
    # w2_ref   : (Cout, Cinter)  bf16 1x1 conv weights (transposed)
    # b2_ref   : (Cout, 1)       f32 1x1 conv bias
    # o_ref    : (1, Cout, TP)   f32 output tile
    patches = p_ref[0]                                   # (9*Cin, TP) bf16

    # 3x3 conv (padding=1) as a single wide-K MXU matmul.
    y = jnp.dot(w1_ref[...], patches,
                preferred_element_type=jnp.float32)      # (Cinter, TP) f32

    # BatchNorm (inference, folded) + ReLU, in f32.
    y = y * scale_ref[...] + bias_ref[...]
    y = jnp.maximum(y, 0.0)

    # Dropout(0.1) is identity in eval mode.
    # TODO(synk): training-mode dropout (pltpu.prng_random_bits mask) not implemented.

    # 1x1 conv == channel matmul, plus bias.
    z = jnp.dot(w2_ref[...], y.astype(jnp.bfloat16),
                preferred_element_type=jnp.float32)      # (Cout, TP) f32
    z = z + b2_ref[...]

    o_ref[0] = z.astype(o_ref.dtype)


def _pick_row_tile(H, W):
    """Smallest divisor of H whose pixel count is a multiple of 128 (lane-dense)."""
    for rt in range(1, H + 1):
        if H % rt == 0 and (rt * W) % 128 == 0:
            return rt
    return H  # fall back to full image (block == full dim is always legal)


def fcn_head_forward(x_nchw, w1_hwio, bn_gamma, bn_beta, bn_mean, bn_var,
                     w2_io, b2, eps=1e-5, row_tile=None):
    """x_nchw: (N, Cin, H, W) float32. Returns (N, Cout, H, W) float32."""
    N, Cin, H, W = x_nchw.shape
    Cinter = w1_hwio.shape[-1]
    Cout = w2_io.shape[-1]

    if row_tile is None:
        row_tile = _pick_row_tile(H, W)
    TP = row_tile * W
    n_tiles = H // row_tile

    # Spatial zero padding for the 3x3 / padding=1 conv (stay channels-first).
    x_pad = jnp.pad(x_nchw, ((0, 0), (0, 0), (1, 1), (1, 1)))

    # Channels-first im2col: (N, 9*Cin, H*W), tap-major order (kh, kw, cin)
    # matching w1_hwio.reshape(9*Cin, Cinter).
    taps = []
    for kh in range(3):
        for kw in range(3):
            taps.append(x_pad[:, :, kh:kh + H, kw:kw + W].reshape(N, Cin, H * W))
    patches = jnp.concatenate(taps, axis=1).astype(jnp.bfloat16)  # (N, 9*Cin, H*W)

    # Fused / transposed weights (bf16 matmul operands), folded BN params (f32).
    w1t = jnp.transpose(w1_hwio.reshape(9 * Cin, Cinter)).astype(jnp.bfloat16)  # (Cinter, 9*Cin)
    w2t = jnp.transpose(w2_io).astype(jnp.bfloat16)                             # (Cout, Cinter)
    inv_std = 1.0 / jnp.sqrt(bn_var + eps)
    scale = (bn_gamma * inv_std).reshape(Cinter, 1).astype(jnp.float32)
    bias = (bn_beta - bn_mean * bn_gamma * inv_std).reshape(Cinter, 1).astype(jnp.float32)
    b2r = b2.reshape(Cout, 1).astype(jnp.float32)

    out_flat = pl.pallas_call(
        _fcn_head_kernel,
        out_shape=jax.ShapeDtypeStruct((N, Cout, H * W), jnp.float32),
        grid_spec=pltpu.PrefetchScalarGridSpec(
            num_scalar_prefetch=0,
            grid=(N, n_tiles),
            in_specs=[
                pl.BlockSpec((1, 9 * Cin, TP), lambda n, t: (n, 0, t)),
                pl.BlockSpec((Cinter, 9 * Cin), lambda n, t: (0, 0)),
                pl.BlockSpec((Cinter, 1), lambda n, t: (0, 0)),
                pl.BlockSpec((Cinter, 1), lambda n, t: (0, 0)),
                pl.BlockSpec((Cout, Cinter), lambda n, t: (0, 0)),
                pl.BlockSpec((Cout, 1), lambda n, t: (0, 0)),
            ],
            out_specs=pl.BlockSpec((1, Cout, TP), lambda n, t: (n, 0, t)),
        ),
        compiler_params=pltpu.CompilerParams(
            dimension_semantics=("parallel", "parallel"),
            vmem_limit_bytes=32 * 1024 * 1024,
        ),
    )(patches, w1t, scale, bias, w2t, b2r)

    # (N, Cout, H*W) -> (N, Cout, H, W): pure reshape, no transpose / HBM pass.
    return out_flat.reshape(N, Cout, H, W)


def _reference(x_nchw, w1_hwio, bn_gamma, bn_beta, bn_mean, bn_var, w2_io, b2,
               eps=1e-5):
    # Pure-JAX f32 reference (lax conv, NCHW) for validation.
    w1_oihw = jnp.transpose(w1_hwio, (3, 2, 0, 1))  # HWIO -> OIHW
    y = jax.lax.conv_general_dilated(
        x_nchw, w1_oihw, window_strides=(1, 1), padding=((1, 1), (1, 1)),
        dimension_numbers=("NCHW", "OIHW", "NCHW"))
    inv_std = 1.0 / jnp.sqrt(bn_var + eps)
    y = (y - bn_mean[None, :, None, None]) * inv_std[None, :, None, None]
    y = y * bn_gamma[None, :, None, None] + bn_beta[None, :, None, None]
    y = jnp.maximum(y, 0.0)
    w2_oihw = jnp.transpose(w2_io, (1, 0))[:, :, None, None]  # (Cout, Cinter, 1, 1)
    z = jax.lax.conv_general_dilated(
        y, w2_oihw, window_strides=(1, 1), padding=((0, 0), (0, 0)),
        dimension_numbers=("NCHW", "OIHW", "NCHW"))
    return z + b2[None, :, None, None]


if __name__ == "__main__":
    # _FCNHead(in_channels=16, channels=4) -> inter_channels = 16 // 4 = 4
    N, Cin, H, W = 2, 16, 16, 16
    Cinter, Cout = Cin // 4, 4

    key = jax.random.PRNGKey(0)
    ks = jax.random.split(key, 8)
    x = jax.random.normal(ks[0], (N, Cin, H, W), jnp.float32)
    w1 = jax.random.normal(ks[1], (3, 3, Cin, Cinter), jnp.float32) * 0.1   # HWIO
    w2 = jax.random.normal(ks[2], (Cinter, Cout), jnp.float32) * 0.1        # IO
    b2 = jax.random.normal(ks[3], (Cout,), jnp.float32) * 0.1
    bn_gamma = 1.0 + 0.1 * jax.random.normal(ks[4], (Cinter,), jnp.float32)
    bn_beta = 0.1 * jax.random.normal(ks[5], (Cinter,), jnp.float32)
    bn_mean = 0.1 * jax.random.normal(ks[6], (Cinter,), jnp.float32)
    bn_var = jnp.abs(1.0 + 0.1 * jax.random.normal(ks[7], (Cinter,), jnp.float32))

    out = jax.block_until_ready(
        fcn_head_forward(x, w1, bn_gamma, bn_beta, bn_mean, bn_var, w2, b2))
    ref = jax.block_until_ready(
        _reference(x, w1, bn_gamma, bn_beta, bn_mean, bn_var, w2, b2))

    assert out.shape == (N, Cout, H, W)
    err = float(jnp.max(jnp.abs(out - ref)))
    # bf16 matmul operands with f32 accumulation -> tolerance loosened vs the
    # pure-f32 reference (per review guidance).
    assert err < 5e-2, f"max abs err {err}"

    print("KERNEL_OK")
</pallas_src>

<mosaic_0001>
module attributes {stable_mosaic.version = 11 : i64} {
  func.func @_fcn_head_kernel(%arg0: i32, %arg1: i32, %arg2: memref<1x144x128xbf16, #tpu.memory_space<vmem>>, %arg3: memref<4x144xbf16, #tpu.memory_space<vmem>>, %arg4: memref<4x1xf32, #tpu.memory_space<vmem>>, %arg5: memref<4x1xf32, #tpu.memory_space<vmem>>, %arg6: memref<4x4xbf16, #tpu.memory_space<vmem>>, %arg7: memref<4x1xf32, #tpu.memory_space<vmem>>, %arg8: memref<1x4x128xf32, #tpu.memory_space<vmem>>) attributes {dimension_semantics = [#tpu.dimension_semantics<parallel>, #tpu.dimension_semantics<parallel>], iteration_bounds = array<i64: 2, 2>, scalar_prefetch = 0 : i64, scratch_operands = 0 : i64, tpu.core_type = #tpu.core_type<tc>, window_params = [{transform_indices = @transform_0, window_bounds = array<i64: 1, 144, 128>}, {pipeline_mode = #tpu.pipeline_mode<synchronous>, transform_indices = @transform_1, window_bounds = array<i64: 4, 144>}, {pipeline_mode = #tpu.pipeline_mode<synchronous>, transform_indices = @transform_2, window_bounds = array<i64: 4, 1>}, {pipeline_mode = #tpu.pipeline_mode<synchronous>, transform_indices = @transform_3, window_bounds = array<i64: 4, 1>}, {pipeline_mode = #tpu.pipeline_mode<synchronous>, transform_indices = @transform_4, window_bounds = array<i64: 4, 4>}, {pipeline_mode = #tpu.pipeline_mode<synchronous>, transform_indices = @transform_5, window_bounds = array<i64: 4, 1>}, {transform_indices = @transform_6, window_bounds = array<i64: 1, 4, 128>}]} {
    %c0 = arith.constant 0 : index
    %c0_0 = arith.constant 0 : index
    %c0_1 = arith.constant 0 : index
    %0 = vector.load %arg2[%c0, %c0_0, %c0_1] : memref<1x144x128xbf16, #tpu.memory_space<vmem>>, vector<1x144x128xbf16>
    %1 = vector.shape_cast %0 : vector<1x144x128xbf16> to vector<144x128xbf16>
    %c0_2 = arith.constant 0 : index
    %c0_3 = arith.constant 0 : index
    %2 = vector.load %arg3[%c0_2, %c0_3] : memref<4x144xbf16, #tpu.memory_space<vmem>>, vector<4x144xbf16>
    %cst = arith.constant dense<0.000000e+00> : vector<4x128xf32>
    %3 = tpu.matmul %2, %1, %cst {dimension_numbers = #tpu.dot_dimension_numbers<[1], [0], [0], [1], [0, 0, 1, 1], [], []>} : vector<4x144xbf16>, vector<144x128xbf16>, vector<4x128xf32> -> vector<4x128xf32>
    %c0_4 = arith.constant 0 : index
    %c0_5 = arith.constant 0 : index
    %4 = vector.load %arg4[%c0_4, %c0_5] : memref<4x1xf32, #tpu.memory_space<vmem>>, vector<4x1xf32>
    %5 = vector.broadcast %4 : vector<4x1xf32> to vector<4x128xf32>
    %6 = arith.mulf %3, %5 : vector<4x128xf32>
    %c0_6 = arith.constant 0 : index
    %c0_7 = arith.constant 0 : index
    %7 = vector.load %arg5[%c0_6, %c0_7] : memref<4x1xf32, #tpu.memory_space<vmem>>, vector<4x1xf32>
    %8 = vector.broadcast %7 : vector<4x1xf32> to vector<4x128xf32>
    %9 = arith.addf %6, %8 : vector<4x128xf32>
    %cst_8 = arith.constant 0.000000e+00 : f32
    %10 = vector.broadcast %cst_8 : f32 to vector<4x128xf32>
    %11 = arith.maximumf %9, %10 : vector<4x128xf32>
    %c0_9 = arith.constant 0 : index
    %c0_10 = arith.constant 0 : index
    %12 = vector.load %arg6[%c0_9, %c0_10] : memref<4x4xbf16, #tpu.memory_space<vmem>>, vector<4x4xbf16>
    %13 = arith.truncf %11 : vector<4x128xf32> to vector<4x128xbf16>
    %cst_11 = arith.constant dense<0.000000e+00> : vector<4x128xf32>
    %14 = tpu.matmul %12, %13, %cst_11 {dimension_numbers = #tpu.dot_dimension_numbers<[1], [0], [0], [1], [0, 0, 1, 1], [], []>} : vector<4x4xbf16>, vector<4x128xbf16>, vector<4x128xf32> -> vector<4x128xf32>
    %c0_12 = arith.constant 0 : index
    %c0_13 = arith.constant 0 : index
    %15 = vector.load %arg7[%c0_12, %c0_13] : memref<4x1xf32, #tpu.memory_space<vmem>>, vector<4x1xf32>
    %16 = vector.broadcast %15 : vector<4x1xf32> to vector<4x128xf32>
    %17 = arith.addf %14, %16 : vector<4x128xf32>
    %c0_14 = arith.constant 0 : index
    %c0_15 = arith.constant 0 : index
    %c0_16 = arith.constant 0 : index
    %18 = vector.load %arg8[%c0_14, %c0_15, %c0_16] : memref<1x4x128xf32, #tpu.memory_space<vmem>>, vector<1x4x128xf32>
    %19 = vector.shape_cast %18 : vector<1x4x128xf32> to vector<4x128xf32>
    %20 = vector.shape_cast %17 : vector<4x128xf32> to vector<1x4x128xf32>
    tpu.vector_store %arg8[%c0_14, %c0_15, %c0_16], %20 {strides = array<i32>} : memref<1x4x128xf32, #tpu.memory_space<vmem>>, vector<1x4x128xf32>,
    return
  }
  func.func @transform_0(%arg0: i32, %arg1: i32) -> (i32, i32, i32) {
    %c0_i32 = arith.constant 0 : i32
    %c0_i32_0 = arith.constant 0 : i32
    return %arg0, %c0_i32, %arg1 : i32, i32, i32
  }
  func.func @transform_1(%arg0: i32, %arg1: i32) -> (i32, i32) {
    %c0_i32 = arith.constant 0 : i32
    %c0_i32_0 = arith.constant 0 : i32
    %c0_i32_1 = arith.constant 0 : i32
    return %c0_i32, %c0_i32_0 : i32, i32
  }
  func.func @transform_2(%arg0: i32, %arg1: i32) -> (i32, i32) {
    %c0_i32 = arith.constant 0 : i32
    %c0_i32_0 = arith.constant 0 : i32
    %c0_i32_1 = arith.constant 0 : i32
    return %c0_i32, %c0_i32_0 : i32, i32
  }
  func.func @transform_3(%arg0: i32, %arg1: i32) -> (i32, i32) {
    %c0_i32 = arith.constant 0 : i32
    %c0_i32_0 = arith.constant 0 : i32
    %c0_i32_1 = arith.constant 0 : i32
    return %c0_i32, %c0_i32_0 : i32, i32
  }
  func.func @transform_4(%arg0: i32, %arg1: i32) -> (i32, i32) {
    %c0_i32 = arith.constant 0 : i32
    %c0_i32_0 = arith.constant 0 : i32
    %c0_i32_1 = arith.constant 0 : i32
    return %c0_i32, %c0_i32_0 : i32, i32
  }
  func.func @transform_5(%arg0: i32, %arg1: i32) -> (i32, i32) {
    %c0_i32 = arith.constant 0 : i32
    %c0_i32_0 = arith.constant 0 : i32
    %c0_i32_1 = arith.constant 0 : i32
    return %c0_i32, %c0_i32_0 : i32, i32
  }
  func.func @transform_6(%arg0: i32, %arg1: i32) -> (i32, i32, i32) {
    %c0_i32 = arith.constant 0 : i32
    %c0_i32_0 = arith.constant 0 : i32
    return %arg0, %c0_i32, %arg1 : i32, i32, i32
  }
}

</mosaic_0001>

<llo_original>
// kernel: tpu_custom_call.1
$region0: #{tpu_custom_call.1}
  #allocation0 [shape = 'u32[]', space=smem, size = 0x4, offset = 0x4, fixed_abs, tag = 'smem constant byte address 0x4 - core index']
  #allocation1 [shape = 'u32[144,128]{1,0:T(1,128)}', space=vmem, size = 0x12000, scoped, tag = 'internal scratch']
  %s0 = inlined_call_operand.hbm [shape: bf16[2,144,256], index: 0, kind: input, shape index: {}]
  %s1 = inlined_call_operand.vmem [shape: bf16[4,144], index: 1, kind: input, shape index: {}]
  %s2 = inlined_call_operand.vmem [shape: f32[4,1], index: 2, kind: input, shape index: {}]
  %s3 = inlined_call_operand.vmem [shape: f32[4,1], index: 3, kind: input, shape index: {}]
  %s4 = inlined_call_operand.vmem [shape: bf16[4,4], index: 4, kind: input, shape index: {}]
  %s5 = inlined_call_operand.vmem [shape: f32[4,1], index: 5, kind: input, shape index: {}]
  %s6 = inlined_call_operand.hbm [shape: f32[2,4,256], index: 6, kind: output, shape index: {}]
  %s7 = sld [smem:[#allocation0]]
  $region61: #{tpu_custom_call.1} parent=0
    _
  %s9 = ssub.s32 1, %s7
  %s10 = scalar_select 0, %s9, %s7
  $region1: #{tpu_custom_call.1} parent=0
    #allocation2 [shape = 'u8[73728]{0}', space=vmem, size = 0x12000, scoped, tag = 'input window, operand 0']
    #allocation3 [shape = 's32[2]{0}', space=sflag, size = 0x8, scoped, tag = 'scoped memory for tpu_custom_call.1']
    #allocation4 [shape = 's32[2]{0}', space=sflag, size = 0x8, scoped, tag = 'scoped memory for tpu_custom_call.1']
    #allocation5 [shape = 'u8[4096]{0}', space=vmem, size = 0x1000, scoped, tag = 'output window, operand 0']
    %11 = vsyncpa [#allocation3], 0
    %s12 = scalar_lea.sflag [#allocation3], 1
    %13 = vsyncpa %s12, 0
    %14 = vsyncpa [#allocation4], 0
    %s15 = scalar_lea.sflag [#allocation4], 1
    %16 = vsyncpa %s15, 0
    loop: start=0, step=1, limit=6
    $region2: #{tpu_custom_call.1} parent=1 // loop_pre_header
      _
    $region3: #{tpu_custom_call.1} parent=1 // loop_header
      %s18 = sphi 0, %s22
      %p19 = scmp.ge.s32.totalorder %s18, 6
      %s25 = sphi 0, %s37
      %s26 = sphi 0, %s33
      %s27 = sphi 0, %s25
      %s28 = sphi 0, %s26
      %s29 = sphi 0, %s27
      %s30 = sphi 0, %s28
      %s42 = sphi 0, %s44
      %s45 = sphi 0, %s42
      %s46 = sphi 0, %s45
      %s62 = sphi 0, %s46
      %s66 = sphi 0, %s66
      %s68 = sphi 0, %s66
      %s69 = sphi 0, %s68
      %s83 = sphi 0, %s69
      %s87 = sphi 0, %s87
      %s89 = sphi 0, %s87
      %s90 = sphi 0, %s89
      %s104 = sphi 0, %s90
      %s108 = sphi 0, %s108
      %s110 = sphi 0, %s108
      %s111 = sphi 0, %s110
      %s125 = sphi 0, %s111
      %s129 = sphi 0, %s129
      %s131 = sphi 0, %s129
      %s132 = sphi 0, %s131
      %s146 = sphi 0, %s132
      %s150 = sphi 0, %s150
      %s152 = sphi 0, %s150
      %s153 = sphi 0, %s152
      %s167 = sphi 0, %s153
      %s175 = sphi 0, %s177
      %s178 = sphi 0, %s175
      %s179 = sphi 0, %s178
      %s195 = sphi 0, %s179
    $region4: #{tpu_custom_call.1} parent=1 // loop_header_branch
      %21 = sbr.rel (%p19) target = $region8
    $region5: #{tpu_custom_call.1} parent=1 // loop_body
      %s23 = ssub.s32 %s18, 1
      %s24 = ssub.s32 %s18, 2
      %s31 = sadd.s32 1, %s26
      %p32 = scmp.ge.s32.totalorder %s31, 2
      %s33 = scalar_select %p32, 0, %s31
      %s34 = sadd.s32 1, %s25
      %s35 = scalar_select %p32, %s34, %s25
      %p36 = scmp.ge.s32.totalorder %s35, 2
      %s37 = scalar_select %p36, 0, %s35
      %s38 = ssub.s32 %s25, %s37
      %s39 = ssub.s32 %s26, %s33
      %s40 = sor.u32 %s38, %s39
      %p41 = scmp.eq.s32.totalorder %s40, 0
      %s43 = sadd.s32 %s42, 1
      %s44 = scalar_select %p41, %s42, %s43
      %p47 = pneg %p41
      %p48 = scmp.eq.s32.totalorder %s18, 3
      %p49 = por %p47, %p48
      %p50 = scmp.ne.s32.totalorder %s42, %s45
      %p51 = scmp.eq.s32.totalorder %s18, 0
      %p52 = por %p50, %p51
      %p53 = scmp.ne.s32.totalorder %s42, %s45
      %p54 = scmp.eq.s32.totalorder %s23, 3
      %p55 = por %p53, %p54
      %p56 = scmp.ne.s32.totalorder %s45, %s46
      %p57 = scmp.eq.s32.totalorder %s23, 0
      %p58 = por %p56, %p57
      %p59 = scmp.ne.s32.totalorder %s45, %s46
      %p60 = scmp.eq.s32.totalorder %s24, 3
      %p61 = por %p59, %p60
      %p63 = scmp.ne.s32.totalorder %s46, %s62
      %p64 = scmp.eq.s32.totalorder %s24, 0
      %p65 = por %p63, %p64
      %s67 = sadd.s32 %s66, 1
      %p70 = scmp.eq.s32.totalorder %s18, 3
      %p71 = scmp.ne.s32.totalorder %s66, %s68
      %p72 = scmp.eq.s32.totalorder %s18, 0
      %p73 = por %p71, %p72
      %p74 = scmp.ne.s32.totalorder %s66, %s68
      %p75 = scmp.eq.s32.totalorder %s23, 3
      %p76 = por %p74, %p75
      %p77 = scmp.ne.s32.totalorder %s68, %s69
      %p78 = scmp.eq.s32.totalorder %s23, 0
      %p79 = por %p77, %p78
      %p80 = scmp.ne.s32.totalorder %s68, %s69
      %p81 = scmp.eq.s32.totalorder %s24, 3
      %p82 = por %p80, %p81
      %p84 = scmp.ne.s32.totalorder %s69, %s83
      %p85 = scmp.eq.s32.totalorder %s24, 0
      %p86 = por %p84, %p85
      %s88 = sadd.s32 %s87, 1
      %p91 = scmp.eq.s32.totalorder %s18, 3
      %p92 = scmp.ne.s32.totalorder %s87, %s89
      %p93 = scmp.eq.s32.totalorder %s18, 0
      %p94 = por %p92, %p93
      %p95 = scmp.ne.s32.totalorder %s87, %s89
      %p96 = scmp.eq.s32.totalorder %s23, 3
      %p97 = por %p95, %p96
      %p98 = scmp.ne.s32.totalorder %s89, %s90
      %p99 = scmp.eq.s32.totalorder %s23, 0
      %p100 = por %p98, %p99
      %p101 = scmp.ne.s32.totalorder %s89, %s90
      %p102 = scmp.eq.s32.totalorder %s24, 3
      %p103 = por %p101, %p102
      %p105 = scmp.ne.s32.totalorder %s90, %s104
      %p106 = scmp.eq.s32.totalorder %s24, 0
      %p107 = por %p105, %p106
      %s109 = sadd.s32 %s108, 1
      %p112 = scmp.eq.s32.totalorder %s18, 3
      %p113 = scmp.ne.s32.totalorder %s108, %s110
      %p114 = scmp.eq.s32.totalorder %s18, 0
      %p115 = por %p113, %p114
      %p116 = scmp.ne.s32.totalorder %s108, %s110
      %p117 = scmp.eq.s32.totalorder %s23, 3
      %p118 = por %p116, %p117
      %p119 = scmp.ne.s32.totalorder %s110, %s111
      %p120 = scmp.eq.s32.totalorder %s23, 0
      %p121 = por %p119, %p120
      %p122 = scmp.ne.s32.totalorder %s110, %s111
      %p123 = scmp.eq.s32.totalorder %s24, 3
      %p124 = por %p122, %p123
      %p126 = scmp.ne.s32.totalorder %s111, %s125
      %p127 = scmp.eq.s32.totalorder %s24, 0
      %p128 = por %p126, %p127
      %s130 = sadd.s32 %s129, 1
      %p133 = scmp.eq.s32.totalorder %s18, 3
      %p134 = scmp.ne.s32.totalorder %s129, %s131
      %p135 = scmp.eq.s32.totalorder %s18, 0
      %p136 = por %p134, %p135
      %p137 = scmp.ne.s32.totalorder %s129, %s131
      %p138 = scmp.eq.s32.totalorder %s23, 3
      %p139 = por %p137, %p138
      %p140 = scmp.ne.s32.totalorder %s131, %s132
      %p141 = scmp.eq.s32.totalorder %s23, 0
      %p142 = por %p140, %p141
      %p143 = scmp.ne.s32.totalorder %s131, %s132
      %p144 = scmp.eq.s32.totalorder %s24, 3
      %p145 = por %p143, %p144
      %p147 = scmp.ne.s32.totalorder %s132, %s146
      %p148 = scmp.eq.s32.totalorder %s24, 0
      %p149 = por %p147, %p148
      %s151 = sadd.s32 %s150, 1
      %p154 = scmp.eq.s32.totalorder %s18, 3
      %p155 = scmp.ne.s32.totalorder %s150, %s152
      %p156 = scmp.eq.s32.totalorder %s18, 0
      %p157 = por %p155, %p156
      %p158 = scmp.ne.s32.totalorder %s150, %s152
      %p159 = scmp.eq.s32.totalorder %s23, 3
      %p160 = por %p158, %p159
      %p161 = scmp.ne.s32.totalorder %s152, %s153
      %p162 = scmp.eq.s32.totalorder %s23, 0
      %p163 = por %p161, %p162
      %p164 = scmp.ne.s32.totalorder %s152, %s153
      %p165 = scmp.eq.s32.totalorder %s24, 3
      %p166 = por %p164, %p165
      %p168 = scmp.ne.s32.totalorder %s153, %s167
      %p169 = scmp.eq.s32.totalorder %s24, 0
      %p170 = por %p168, %p169
      %s171 = ssub.s32 %s25, %s37
      %s172 = ssub.s32 %s26, %s33
      %s173 = sor.u32 %s171, %s172
      %p174 = scmp.eq.s32.totalorder %s173, 0
      %s176 = sadd.s32 %s175, 1
      %s177 = scalar_select %p174, %s175, %s176
      %p180 = pneg %p174
      %p181 = scmp.eq.s32.totalorder %s18, 3
      %p182 = por %p180, %p181
      %p183 = scmp.ne.s32.totalorder %s175, %s178
      %p184 = scmp.eq.s32.totalorder %s18, 0
      %p185 = por %p183, %p184
      %p186 = scmp.ne.s32.totalorder %s175, %s178
      %p187 = scmp.eq.s32.totalorder %s23, 3
      %p188 = por %p186, %p187
      %p189 = scmp.ne.s32.totalorder %s178, %s179
      %p190 = scmp.eq.s32.totalorder %s23, 0
      %p191 = por %p189, %p190
      %p192 = scmp.ne.s32.totalorder %s178, %s179
      %p193 = scmp.eq.s32.totalorder %s24, 3
      %p194 = por %p192, %p193
      %p196 = scmp.ne.s32.totalorder %s179, %s195
      %p197 = scmp.eq.s32.totalorder %s24, 0
      %p198 = por %p196, %p197
      %p199 = scmp.le.s32.totalorder 1, %s18
      %p200 = scmp.lt.s32.totalorder %s18, 5
      %p201 = pnand %p199, %p200
      %p202 = pneg %p201
      // Predicated region
      $region9: #{tpu_custom_call.1} parent=5 // pred_check
        _
      $region10: #{tpu_custom_call.1} parent=5 // pred_check_branch
        %204 = sbr.rel (%p201) target = $region12
      $region11: #{tpu_custom_call.1} parent=5 // pred_region
        %s205 = ssub.s32 %s18, 1
        // Predicated region
        $region13: #{tpu_custom_call.1} parent=11 // pred_check
          %p206 = pneg %p79
        $region14: #{tpu_custom_call.1} parent=11 // pred_check_branch
          %208 = sbr.rel (%p206) target = $region16
        $region15: #{tpu_custom_call.1} parent=11 // pred_region
          _
        $region16: #{tpu_custom_call.1} parent=11 // pred_fallthru
          _
        // Predicated region
        $region17: #{tpu_custom_call.1} parent=11 // pred_check
          %p209 = pneg %p100
        $region18: #{tpu_custom_call.1} parent=11 // pred_check_branch
          %211 = sbr.rel (%p209) target = $region20
        $region19: #{tpu_custom_call.1} parent=11 // pred_region
          _
        $region20: #{tpu_custom_call.1} parent=11 // pred_fallthru
          _
        // Predicated region
        $region21: #{tpu_custom_call.1} parent=11 // pred_check
          %p212 = pneg %p121
        $region22: #{tpu_custom_call.1} parent=11 // pred_check_branch
          %214 = sbr.rel (%p212) target = $region24
        $region23: #{tpu_custom_call.1} parent=11 // pred_region
          _
        $region24: #{tpu_custom_call.1} parent=11 // pred_fallthru
          _
        // Predicated region
        $region25: #{tpu_custom_call.1} parent=11 // pred_check
          %p215 = pneg %p142
        $region26: #{tpu_custom_call.1} parent=11 // pred_check_branch
          %217 = sbr.rel (%p215) target = $region28
        $region27: #{tpu_custom_call.1} parent=11 // pred_region
          _
        $region28: #{tpu_custom_call.1} parent=11 // pred_fallthru
          _
        // Predicated region
        $region29: #{tpu_custom_call.1} parent=11 // pred_check
          %p218 = pneg %p163
        $region30: #{tpu_custom_call.1} parent=11 // pred_check_branch
          %220 = sbr.rel (%p218) target = $region32
        $region31: #{tpu_custom_call.1} parent=11 // pred_region
          _
        $region32: #{tpu_custom_call.1} parent=11 // pred_fallthru
          _
      $region12: #{tpu_custom_call.1} parent=5 // pred_fallthru
        _
      %p221 = scmp.lt.s32.totalorder %s18, 4
      // Predicated region
      $region33: #{tpu_custom_call.1} parent=5 // pred_check
        %p222 = pneg %p221
      $region34: #{tpu_custom_call.1} parent=5 // pred_check_branch
        %224 = sbr.rel (%p222) target = $region36
      $region35: #{tpu_custom_call.1} parent=5 // pred_region
        // Predicated region
        $region37: #{tpu_custom_call.1} parent=35 // pred_check
          %p225 = pneg %p52
        $region38: #{tpu_custom_call.1} parent=35 // pred_check_branch
          %227 = sbr.rel (%p225) target = $region40
        $region39: #{tpu_custom_call.1} parent=35 // pred_region
          %s228 = sand.u32 %s42, 1
          %s229 = scalar_lea.sflag [#allocation3], %s228
          %s230 = sand.u32 %s42, 1
          %s231 = smul.addr %s230, 72
          %s232 = scalar_lea.vmem [#allocation2], %s231
          %s234 = ssub.s32 1152, 1152
          %235 = vsyncadd %s229, %s234
          %s236 = smul.addr %s25, 36
          %s237 = sadd.s32 %s26, %s236
          %s238 = smul.addr %s237, 64
          %s239 = scalar_lea.hbm %s0, %s238
          %s240 = sshll.u32 %s232, 4
          %s241 = int_to_ptr.vmem [resolvable:$true] %s240
          %246 = dma.hbm_to_vmem [thread:$0]  %s239, 1152, %s241, %s229, 128, 64, 4
        $region40: #{tpu_custom_call.1} parent=35 // pred_fallthru
          _
      $region36: #{tpu_custom_call.1} parent=5 // pred_fallthru
        _
      %p247 = scmp.le.s32.totalorder 1, %s18
      %p248 = scmp.lt.s32.totalorder %s18, 5
      %p249 = pnand %p247, %p248
      %p250 = pneg %p249
      // Predicated region
      $region41: #{tpu_custom_call.1} parent=5 // pred_check
        _
      $region42: #{tpu_custom_call.1} parent=5 // pred_check_branch
        %252 = sbr.rel (%p249) target = $region44
      $region43: #{tpu_custom_call.1} parent=5 // pred_region
        %s253 = ssub.s32 %s18, 1
        %s254 = sand.u32 %s45, 1
        %s255 = scalar_lea.sflag [#allocation3], %s254
        %s256 = sand.u32 %s45, 1
        %s257 = smul.addr %s256, 72
        %s258 = scalar_lea.vmem [#allocation2], %s257
        // Predicated region
        $region45: #{tpu_custom_call.1} parent=43 // pred_check
          %p259 = pneg %p58
        $region46: #{tpu_custom_call.1} parent=43 // pred_check_branch
          %261 = sbr.rel (%p259) target = $region48
        $region47: #{tpu_custom_call.1} parent=43 // pred_region
          %262 = dma.done %s255, 1152
        $region48: #{tpu_custom_call.1} parent=43 // pred_fallthru
          _
        %s263 = sand.u32 %s45, 1
        %s264 = scalar_lea.sflag [#allocation3], %s263
        %s265 = sand.u32 %s45, 1
        %s266 = smul.addr %s265, 72
        %s267 = scalar_lea.vmem [#allocation2], %s266
        %p268 = pneg %p58
        %p269 = pneg %p55
        %p270 = pneg %p79
        %p271 = pneg %p76
        %p272 = pneg %p100
        %p273 = pneg %p97
        %p274 = pneg %p121
        %p275 = pneg %p118
        %p276 = pneg %p142
        %p277 = pneg %p139
        %p278 = pneg %p163
        %p279 = pneg %p160
        %p280 = pneg %p191
        %p281 = pneg %p188
        %s282 = sand.u32 %s178, 1
        %s283 = scalar_lea.sflag [#allocation4], %s282
        %s284 = sand.u32 %s178, 1
        %s285 = smul.addr %s284, 4
        %s286 = scalar_lea.vmem [#allocation5], %s285
        %v288 = vld [vmem:[%s258] sm:$0xf]
        %v289 = vld [vmem:[%s258 + $0x4] sm:$0xf]
        %v290 = vld [vmem:[%s258 + $0x8] sm:$0xf]
        %v291 = vld [vmem:[%s258 + $0xc] sm:$0xf]
        %v292 = vld [vmem:[%s258 + $0x10] sm:$0xf]
        %v293 = vld [vmem:[%s258 + $0x14] sm:$0xf]
        %v294 = vld [vmem:[%s258 + $0x18] sm:$0xf]
        %v295 = vld [vmem:[%s258 + $0x1c] sm:$0xf]
        %v296 = vld [vmem:[%s258 + $0x20] sm:$0xf]
        %v297 = vld [vmem:[%s258 + $0x24] sm:$0xf]
        %v298 = vld [vmem:[%s258 + $0x28] sm:$0xf]
        %v299 = vld [vmem:[%s258 + $0x2c] sm:$0xf]
        %v300 = vld [vmem:[%s258 + $0x30] sm:$0xf]
        %v301 = vld [vmem:[%s258 + $0x34] sm:$0xf]
        %v302 = vld [vmem:[%s258 + $0x38] sm:$0xf]
        %v303 = vld [vmem:[%s258 + $0x3c] sm:$0xf]
        %v304 = vld [vmem:[%s258 + $0x40] sm:$0xf]
        %v305 = vld [vmem:[%s258 + $0x44] sm:$0xf]
        %v306 = vld [vmem:[%s1] sm:$0xf]
        %v309 = vunpack.c.l.s4 1983009808
        %v310 = vunpack.c.0.s8 %v309
        %v311 = vlaneseq
        %v312 = vshrl.u32 %v311, 7
        %v313 = vsub.s32 %v310, %v312
        %v314 = vrot.slane %v306, %v313
        %v315 = vcombine.high %v314, %v314
        %v335 = vunpack.c.l.b16 %v288
        %v336 = vunpack.c.l.b16 %v289
        %v337 = vunpack.c.l.b16 %v290
        %v338 = vunpack.c.l.b16 %v291
        %v339 = vunpack.c.l.b16 %v292
        %v340 = vunpack.c.l.b16 %v293
        %v341 = vunpack.c.l.b16 %v294
        %v342 = vunpack.c.l.b16 %v295
        %v343 = vunpack.c.l.b16 %v296
        %v344 = vunpack.c.l.b16 %v297
        %v345 = vunpack.c.l.b16 %v298
        %v346 = vunpack.c.l.b16 %v299
        %v347 = vunpack.c.l.b16 %v300
        %v348 = vunpack.c.l.b16 %v301
        %v349 = vunpack.c.l.b16 %v302
        %v350 = vunpack.c.l.b16 %v303
        %v351 = vunpack.c.l.b16 %v304
        %v352 = vunpack.c.l.b16 %v305
        %v353 = vpack.c.b16 %v336, %v335
        %v354 = vpack.c.b16 %v338, %v337
        %v355 = vpack.c.b16 %v340, %v339
        %v356 = vpack.c.b16 %v342, %v341
        %v357 = vpack.c.b16 %v344, %v343
        %v358 = vpack.c.b16 %v346, %v345
        %v359 = vpack.c.b16 %v348, %v347
        %v360 = vpack.c.b16 %v350, %v349
        %v361 = vpack.c.b16 %v352, %v351
        %vm371 = vcmask 130048
        %v373 = vsel %vm371, %v315, 0
        %375 = vmatprep.subr.bf16.mxu0 0
        %376 = vmatpush1.bf16.msra.mxu0 %v353
        %377 = vmatprep.subr.bf16.mxu0 0
        %378 = vmatpush1.bf16.msra.mxu0 %v354
        %379 = vmatprep.subr.bf16.mxu0 0
        %380 = vmatpush1.bf16.msra.mxu0 %v355
        %381 = vmatprep.subr.bf16.mxu0 0
        %382 = vmatpush1.bf16.msra.mxu0 %v356
        %383 = vmatprep.subr.bf16.mxu0 0
        %384 = vmatpush1.bf16.msra.mxu0 %v357
        %385 = vmatprep.subr.bf16.mxu0 0
        %386 = vmatpush1.bf16.msra.mxu0 %v358
        %387 = vmatprep.subr.bf16.mxu0 0
        %388 = vmatpush1.bf16.msra.mxu0 %v359
        %389 = vmatprep.subr.bf16.mxu0 0
        %390 = vmatpush1.bf16.msra.mxu0 %v360
        %391 = vmatprep.subr.bf16.mxu0 0
        %392 = vmatpush1.bf16.msra.mxu0 %v361
        %393 = vmatprep.subr.bf16.mxu0 0
        %394 = vmatpush1.bf16.msra.mxu0 0
        %395 = vmatprep.subr.bf16.mxu0 0
        %396 = vmatpush1.bf16.msra.mxu0 0
        %397 = vmatprep.subr.bf16.mxu0 0
        %398 = vmatpush1.bf16.msra.mxu0 0
        %399 = vmatprep.subr.bf16.mxu0 0
        %400 = vmatpush1.bf16.msra.mxu0 0
        %401 = vmatprep.subr.bf16.mxu0 0
        %402 = vmatpush1.bf16.msra.mxu0 0
        %403 = vmatprep.subr.bf16.mxu0 0
        %404 = vmatpush1.bf16.msra.mxu0 0
        %405 = vmatprep.subr.bf16.mxu0 0
        %406 = vmatpush1.bf16.msra.mxu0 0
        %407 = vmatprep.mubr.bf16.mxu0 %v373
        %408 = vmatmul.mubr.bf16.gmra.mrb[0].mxu0 %v314
        %v409 = vpop.f32.mrb[0].mxu0
        %v410 = vadd.f32 0.0, %v409
        %v411 = vpop.f32.mrb[0].mxu0
        %v412 = vpop.f32.mrb[0].mxu0
        %v413 = vpop.f32.mrb[0].mxu0
        %414 = vdwg.mxu0
        %v415 = vld [vmem:[%s2] sm:$0xf]
        %417 = vset.pattern.permute.xlu0 0
        %418 = vperm.xlu0 %417, %v415
        %v419 = vpop.permute.xlu0 %418
        %v421 = vmul.f32 %v410, %v419
        %v422 = vld [vmem:[%s3] sm:$0xf]
        %424 = vset.pattern.permute.xlu0 0
        %425 = vperm.xlu0 %424, %v422
        %v426 = vpop.permute.xlu0 %425
        %v428 = vadd.f32 %v421, %v426
        %v429 = vmax.f32 %v428, 0.0
        %v430 = vld [vmem:[%s4] sm:$0x3]
        %v431 = vpack.c.bf16 %v429, %v429
        %v432 = vld [vmem:[%s5] sm:$0xf]
        %434 = vset.pattern.permute.xlu0 0
        %435 = vperm.xlu0 %434, %v432
        %v436 = vpop.permute.xlu0 %435
        %vm438 = vcmask 31744
        %v440 = vsel %vm438, %v430, 0
        %vm442 = vcmask 1041408
        %v444 = vsel %vm442, %v431, 0
        %446 = vmatprep.subr.bf16.mxu0 0
        %447 = vmatpush1.bf16.msra.mxu0 %v444
        %448 = vmatprep.subr.bf16.mxu0 0
        %449 = vmatpush1.bf16.msra.mxu0 0
        %450 = vmatprep.subr.bf16.mxu0 0
        %451 = vmatpush1.bf16.msra.mxu0 0
        %452 = vmatprep.subr.bf16.mxu0 0
        %453 = vmatpush1.bf16.msra.mxu0 0
        %454 = vmatprep.subr.bf16.mxu0 0
        %455 = vmatpush1.bf16.msra.mxu0 0
        %456 = vmatprep.subr.bf16.mxu0 0
        %457 = vmatpush1.bf16.msra.mxu0 0
        %458 = vmatprep.subr.bf16.mxu0 0
        %459 = vmatpush1.bf16.msra.mxu0 0
        %460 = vmatprep.subr.bf16.mxu0 0
        %461 = vmatpush1.bf16.msra.mxu0 0
        %462 = vmatprep.subr.bf16.mxu0 0
        %463 = vmatpush1.bf16.msra.mxu0 0
        %464 = vmatprep.subr.bf16.mxu0 0
        %465 = vmatpush1.bf16.msra.mxu0 0
        %466 = vmatprep.subr.bf16.mxu0 0
        %467 = vmatpush1.bf16.msra.mxu0 0
        %468 = vmatprep.subr.bf16.mxu0 0
        %469 = vmatpush1.bf16.msra.mxu0 0
        %470 = vmatprep.subr.bf16.mxu0 0
        %471 = vmatpush1.bf16.msra.mxu0 0
        %472 = vmatprep.subr.bf16.mxu0 0
        %473 = vmatpush1.bf16.msra.mxu0 0
        %474 = vmatprep.subr.bf16.mxu0 0
        %475 = vmatpush1.bf16.msra.mxu0 0
        %476 = vmatprep.subr.bf16.mxu0 0
        %477 = vmatpush1.bf16.msra.mxu0 0
        %478 = vmatprep.mubr.bf16.mxu0 0
        %479 = vmatmul.mubr.bf16.gmra.mrb[0].mxu0 %v440
        %v480 = vpop.f32.mrb[0].mxu0
        %v481 = vadd.f32 %v436, %v480
        %v482 = vpop.f32.mrb[0].mxu0
        %v483 = vpop.f32.mrb[0].mxu0
        %v484 = vpop.f32.mrb[0].mxu0
        %485 = vdwg.mxu0
        %486 = vst [vmem:[%s286] sm:$0xf] %v481
        %s487 = sand.u32 %s178, 1
        %s488 = scalar_lea.sflag [#allocation4], %s487
        %s489 = sand.u32 %s178, 1
        %s490 = smul.addr %s489, 4
        %s491 = scalar_lea.vmem [#allocation5], %s490
        // Predicated region
        $region49: #{tpu_custom_call.1} parent=43 // pred_check
          %p492 = pneg %p188
        $region50: #{tpu_custom_call.1} parent=43 // pred_check_branch
          %494 = sbr.rel (%p492) target = $region52
        $region51: #{tpu_custom_call.1} parent=43 // pred_region
          %s496 = ssub.s32 64, 64
          %497 = vsyncadd %s488, %s496
          %s498 = smul.addr %s27, 2
          %s499 = sadd.s32 %s28, %s498
          %s500 = smul.addr %s499, 64
          %s501 = scalar_lea.hbm %s6, %s500
          %s503 = sshll.u32 %s491, 4
          %s504 = int_to_ptr.vmem [resolvable:$true] %s503
          %506 = dma.vmem_to_hbm [thread:$0]  %s504, 64, %s501, %s488
        $region52: #{tpu_custom_call.1} parent=43 // pred_fallthru
          _
      $region44: #{tpu_custom_call.1} parent=5 // pred_fallthru
        _
      %p507 = scmp.le.s32.totalorder 2, %s18
      // Predicated region
      $region53: #{tpu_custom_call.1} parent=5 // pred_check
        %p508 = pneg %p507
      $region54: #{tpu_custom_call.1} parent=5 // pred_check_branch
        %510 = sbr.rel (%p508) target = $region56
      $region55: #{tpu_custom_call.1} parent=5 // pred_region
        %s511 = ssub.s32 %s18, 2
        // Predicated region
        $region57: #{tpu_custom_call.1} parent=55 // pred_check
          %p512 = pneg %p194
        $region58: #{tpu_custom_call.1} parent=55 // pred_check_branch
          %514 = sbr.rel (%p512) target = $region60
        $region59: #{tpu_custom_call.1} parent=55 // pred_region
          %s515 = sand.u32 %s179, 1
          %s516 = scalar_lea.sflag [#allocation4], %s515
          %s517 = sand.u32 %s179, 1
          %s518 = smul.addr %s517, 4
          %s519 = scalar_lea.vmem [#allocation5], %s518
          %520 = dma.done %s516, 64
        $region60: #{tpu_custom_call.1} parent=55 // pred_fallthru
          _
      $region56: #{tpu_custom_call.1} parent=5 // pred_fallthru
        _
    $region6: #{tpu_custom_call.1} parent=1 // loop_footer
      %s22 = sadd.s32 1, %s18
    $region7: #{tpu_custom_call.1} parent=1 // loop_footer_branch
      %17 = sbr.rel target = $region3
    $region8: #{tpu_custom_call.1} parent=1 // loop_exit
      _
    %521 = vsyncpa [#allocation3], 1
    %s522 = scalar_lea.sflag [#allocation3], 1
    %523 = vsyncpa %s522, 1
    %524 = vsyncpa [#allocation4], 1
    %s525 = scalar_lea.sflag [#allocation4], 1
    %526 = vsyncpa %s525, 1

</llo_original>
